<compile_context>
chip_gen: v7x
topology: tpu7x:2x2x1
jax: 0.10.0
libtpu: 0.0.40
codegen_flags: <defaults>
</compile_context>

<pallas_src>
import jax
import jax.numpy as jnp
from jax.experimental import pallas as pl
from jax.experimental.pallas import tpu as pltpu


_LANE_WIDTH = 512                       # lane-dense slab width (multiple of 128)
_SUBLANE_PACK = {4: 8, 2: 16, 1: 32}    # rows per vreg by element size


def _identity_kernel(x_ref, o_ref):
    # Elementwise pass-through on the current VMEM tile.
    o_ref[...] = x_ref[...]


def _round_up(x: int, m: int) -> int:
    return ((x + m - 1) // m) * m


def _vmem_budget_bytes() -> int:
    """Generation-aware scoped-VMEM budget with headroom for Mosaic scratch.

    ~48 MiB on v7x (64 MiB physical), ~96 MiB on v5e/v6e (128 MiB physical).
    """
    try:
        cap = int(pltpu.get_tpu_info().vmem_capacity_bytes)
    except Exception:  # non-TPU / older runtime fallback
        cap = 128 << 20
    return max(32 << 20, int(0.75 * cap))


def _pick_row_tile(rows: int, itemsize: int, sublane_pack: int,
                   block_byte_target: int) -> int:
    """Sublane-aligned row tile sized from the byte budget.

    No divisibility requirement on `rows`: the grid uses pl.cdiv and Pallas
    masks the partial tail block.  Small arrays become one full-array block
    (always a legal block shape).
    """
    row_bytes = _LANE_WIDTH * itemsize
    budget_rows = max(sublane_pack,
                      (block_byte_target // row_bytes) // sublane_pack * sublane_pack)
    slab_bytes = rows * row_bytes
    if rows <= budget_rows:
        # Megacore: keep >=2 blocks for multi-MiB slabs (v7x has 2 TCs).
        if slab_bytes > (2 << 20) and rows > 2 * sublane_pack:
            return max(sublane_pack, _round_up(pl.cdiv(rows, 2), sublane_pack))
        return rows                      # single block == full array dims
    return budget_rows


@jax.jit
def model_base_forward(x: jax.Array) -> jax.Array:
    """Identity forward for ModelBase, run through a Pallas TPU kernel.

    Flattens the input to a lane-dense (rows, 512) slab (padding only when the
    element count is not a multiple of 512), copies it on-chip with large
    double-buffered tiles, and reshapes/slices back.
    """
    orig_shape = x.shape
    total = x.size
    dtype = x.dtype
    itemsize = jnp.dtype(dtype).itemsize
    sublane_pack = _SUBLANE_PACK.get(itemsize, 8)

    vmem_budget = _vmem_budget_bytes()
    # Roofline-knee block target (~16 MiB), shrunk so 2 in + 2 out double
    # buffers plus headroom fit this generation's scoped-VMEM budget.
    block_byte_target = min(16 << 20, vmem_budget // 5)

    # Lane-dense slab: pad (cheap) instead of falling back to masked stores.
    flat = x.reshape(-1)
    total_padded = _round_up(max(total, 1), _LANE_WIDTH)
    if total_padded != total:
        flat = jnp.pad(flat, (0, total_padded - total))
    rows = total_padded // _LANE_WIDTH
    x2d = flat.reshape(rows, _LANE_WIDTH)

    rt = _pick_row_tile(rows, itemsize, sublane_pack, block_byte_target)
    grid = (pl.cdiv(rows, rt),)

    block_bytes = rt * _LANE_WIDTH * itemsize
    vmem_limit = int(min(vmem_budget, max(32 << 20, 5 * block_bytes)))

    out2d = pl.pallas_call(
        _identity_kernel,
        out_shape=jax.ShapeDtypeStruct((rows, _LANE_WIDTH), dtype),
        grid_spec=pltpu.PrefetchScalarGridSpec(
            num_scalar_prefetch=0,
            grid=grid,
            in_specs=[pl.BlockSpec((rt, _LANE_WIDTH), lambda i: (i, 0))],
            out_specs=pl.BlockSpec((rt, _LANE_WIDTH), lambda i: (i, 0)),
        ),
        compiler_params=pltpu.CompilerParams(
            dimension_semantics=("parallel",),
            vmem_limit_bytes=vmem_limit,
        ),
        # Pure memory op hint for XLA's scheduler (no alias: real read->write).
        cost_estimate=pl.CostEstimate(
            flops=0, transcendentals=0,
            bytes_accessed=2 * rows * _LANE_WIDTH * itemsize),
    )(x2d)

    out_flat = out2d.reshape(-1)
    if total_padded != total:
        out_flat = out_flat[:total]
    return out_flat.reshape(orig_shape)


def model_base_num_trainable_params() -> int:
    # ModelBase.__init__ registers no parameters.
    return 0


if __name__ == "__main__":
    key = jax.random.PRNGKey(0)
    # Small NCHW input consistent with a conv-style model: batch=2, C=4, 16x16.
    x = jax.random.normal(key, (2, 4, 16, 16), dtype=jnp.float32)

    y = model_base_forward(x)
    jax.block_until_ready(y)

    # Identity semantics check + param count.
    assert y.shape == x.shape and y.dtype == x.dtype
    assert bool(jnp.allclose(y, x))
    assert model_base_num_trainable_params() == 0

    # Also exercise a lane-misaligned shape to cover the padding path.
    x_odd = jax.random.normal(key, (3, 5, 7), dtype=jnp.float32)
    y_odd = model_base_forward(x_odd)
    jax.block_until_ready(y_odd)
    assert y_odd.shape == x_odd.shape and bool(jnp.allclose(y_odd, x_odd))

    print("KERNEL_OK")
</pallas_src>

<mosaic_0001>
module attributes {stable_mosaic.version = 11 : i64} {
  func.func @_identity_kernel(%arg0: i32, %arg1: memref<4x512xf32, #tpu.memory_space<vmem>>, %arg2: memref<4x512xf32, #tpu.memory_space<vmem>>) attributes {dimension_semantics = [#tpu.dimension_semantics<parallel>], iteration_bounds = array<i64: 1>, scalar_prefetch = 0 : i64, scratch_operands = 0 : i64, tpu.core_type = #tpu.core_type<tc>, window_params = [{transform_indices = @transform_0, window_bounds = array<i64: 4, 512>}, {transform_indices = @transform_1, window_bounds = array<i64: 4, 512>}]} {
    %c0 = arith.constant 0 : index
    %c0_0 = arith.constant 0 : index
    %0 = vector.load %arg1[%c0, %c0_0] : memref<4x512xf32, #tpu.memory_space<vmem>>, vector<4x512xf32>
    %c0_1 = arith.constant 0 : index
    %c0_2 = arith.constant 0 : index
    %1 = vector.load %arg2[%c0_1, %c0_2] : memref<4x512xf32, #tpu.memory_space<vmem>>, vector<4x512xf32>
    tpu.vector_store %arg2[%c0_1, %c0_2], %0 {strides = array<i32>} : memref<4x512xf32, #tpu.memory_space<vmem>>, vector<4x512xf32>,
    return
  }
  func.func @transform_0(%arg0: i32) -> (i32, i32) {
    %c0_i32 = arith.constant 0 : i32
    %c0_i32_0 = arith.constant 0 : i32
    return %arg0, %c0_i32 : i32, i32
  }
  func.func @transform_1(%arg0: i32) -> (i32, i32) {
    %c0_i32 = arith.constant 0 : i32
    %c0_i32_0 = arith.constant 0 : i32
    return %arg0, %c0_i32 : i32, i32
  }
}

</mosaic_0001>

<llo_original>
// kernel: model_base_forward.1
$region0: #{model_base_forward.1}
  #allocation0 [shape = 'u32[]', space=smem, size = 0x4, offset = 0x4, fixed_abs, tag = 'smem constant byte address 0x4 - core index']
  #allocation1 [shape = 'u32[144,128]{1,0:T(1,128)}', space=vmem, size = 0x12000, scoped, tag = 'internal scratch']
  %s0 = inlined_call_operand.vmem [shape: f32[4,512], index: 0, kind: input, shape index: {}]
  %s1 = inlined_call_operand.vmem [shape: f32[4,512], index: 1, kind: output, shape index: {}]
  %s2 = sld [smem:[#allocation0]]
  $region14: #{model_base_forward.1} parent=0
    _
  %s4 = ssub.s32 1, %s2
  %s5 = scalar_select 0, %s4, %s2
  // Predicated region
  $region2: #{model_base_forward.1} parent=0 // pred_check
    _
  $region3: #{model_base_forward.1} parent=0 // pred_check_branch
    %7 = sbr.rel (0) target = $region5
  $region4: #{model_base_forward.1} parent=0 // pred_region
    _
  $region5: #{model_base_forward.1} parent=0 // pred_fallthru
    _
  %v8 = vld [vmem:[%s0] sm:$0xff]
  %v9 = vld [vmem:[%s0 + $0x8] sm:$0xff]
  %10 = vst [vmem:[%s1] sm:$0xff] %v8
  %11 = vst [vmem:[%s1 + $0x8] sm:$0xff] %v9
  // Predicated region
  $region6: #{model_base_forward.1} parent=0 // pred_check
    _
  $region7: #{model_base_forward.1} parent=0 // pred_check_branch
    %13 = sbr.rel (0) target = $region9
  $region8: #{model_base_forward.1} parent=0 // pred_region
    _
  $region9: #{model_base_forward.1} parent=0 // pred_fallthru
    _
  // Predicated region
  $region10: #{model_base_forward.1} parent=0 // pred_check
    _
  $region11: #{model_base_forward.1} parent=0 // pred_check_branch
    %15 = sbr.rel (0) target = $region13
  $region12: #{model_base_forward.1} parent=0 // pred_region
    _
  $region13: #{model_base_forward.1} parent=0 // pred_fallthru
    _

</llo_original>
